<compile_context>
chip_gen: v7x
topology: tpu7x:2x2x1
jax: 0.10.0
libtpu: 0.0.40
codegen_flags: <defaults>
</compile_context>

<pallas_src>
import jax
import jax.numpy as jnp
from jax import lax
from jax.experimental import pallas as pl
from jax.experimental.pallas import tpu as pltpu


def _linear_sigmoid_kernel(x_ref, w_ref, b_ref, o_ref):
    # x: (tm, K); w: (N, K) (PyTorch nn.Linear layout, contracted on last dim
    # of both operands -> equivalent to x @ w.T, MXU-friendly); b: (1, N).
    y = lax.dot_general(
        x_ref[...],
        w_ref[...],
        dimension_numbers=(((1,), (1,)), ((), ())),
        preferred_element_type=jnp.float32,
    )
    y = y + b_ref[...]                      # (tm, N) + (1, N) broadcast
    o_ref[...] = jax.nn.sigmoid(y).astype(o_ref.dtype)


def random_transformer_forward(x, weight, bias, *, tm=512):
    """y = sigmoid(x @ weight.T + bias).

    x:      (M, K) float32
    weight: (N, K) float32 -- PyTorch nn.Linear layout, NOT transposed here
    bias:   (N,)   float32
    """
    M, K = x.shape
    N, K2 = weight.shape
    assert K == K2 and bias.shape == (N,)

    b2d = bias.reshape(1, N)  # metadata-only reshape (no HBM copy)

    if M <= tm:
        # Tiny problem: everything fits in VMEM; no grid -> no pipeline
        # prologue/epilogue or per-step overhead.
        vmem = pl.BlockSpec(memory_space=pltpu.MemorySpace.VMEM)
        return pl.pallas_call(
            _linear_sigmoid_kernel,
            out_shape=jax.ShapeDtypeStruct((M, N), x.dtype),
            in_specs=[vmem, vmem, vmem],
            out_specs=vmem,
        )(x, weight, b2d)

    # Large batch: stream x / out in (tm, K) / (tm, N) tiles over a 1-D grid on
    # M. Weight and bias have constant index_maps so they stay VMEM-resident
    # across grid steps (no per-tile re-DMA of the 64xK weight).
    # VMEM budget (double-buffered x + out tiles, plus resident weight) is
    # well under v7x's 64 MiB at tm=512, K=256, N=64.
    grid = (pl.cdiv(M, tm),)
    return pl.pallas_call(
        _linear_sigmoid_kernel,
        out_shape=jax.ShapeDtypeStruct((M, N), x.dtype),
        grid=grid,
        in_specs=[
            pl.BlockSpec((tm, K), lambda i: (i, 0)),
            pl.BlockSpec((N, K), lambda i: (0, 0)),
            pl.BlockSpec((1, N), lambda i: (0, 0)),
        ],
        out_specs=pl.BlockSpec((tm, N), lambda i: (i, 0)),
        compiler_params=pltpu.CompilerParams(
            dimension_semantics=("parallel",),
        ),
    )(x, weight, b2d)


def reference_forward(x, weight, bias):
    return jax.nn.sigmoid(x @ weight.T + bias)


if __name__ == "__main__":
    # Shapes consistent with the module defaults: input_size=256, out=64.
    input_size = 256
    out_features = 64
    batch = 8

    key = jax.random.PRNGKey(0)
    kx, kw, kb, kx2 = jax.random.split(key, 4)

    # Deterministic parameter init (mimicking nn.Linear's uniform(-1/sqrt(K), 1/sqrt(K))).
    bound = 1.0 / (input_size ** 0.5)
    weight = jax.random.uniform(
        kw, (out_features, input_size), minval=-bound, maxval=bound, dtype=jnp.float32
    )
    bias = jax.random.uniform(
        kb, (out_features,), minval=-bound, maxval=bound, dtype=jnp.float32
    )

    # Small-batch path (no grid).
    x = jax.random.normal(kx, (batch, input_size), dtype=jnp.float32)
    out = jax.block_until_ready(random_transformer_forward(x, weight, bias))
    ref = reference_forward(x, weight, bias)
    assert out.shape == (batch, out_features)
    assert jnp.allclose(out, ref, atol=1e-5, rtol=1e-5)

    # Batched path (1-D grid over M, "parallel").
    x_big = jax.random.normal(kx2, (1024, input_size), dtype=jnp.float32)
    out_big = jax.block_until_ready(random_transformer_forward(x_big, weight, bias))
    ref_big = reference_forward(x_big, weight, bias)
    assert out_big.shape == (1024, out_features)
    assert jnp.allclose(out_big, ref_big, atol=1e-5, rtol=1e-5)

    print("KERNEL_OK")
</pallas_src>

<mosaic_0001>
module attributes {stable_mosaic.version = 11 : i64} {
  func.func @_linear_sigmoid_kernel(%arg0: memref<8x256xf32, #tpu.memory_space<vmem>>, %arg1: memref<64x256xf32, #tpu.memory_space<vmem>>, %arg2: memref<1x64xf32, #tpu.memory_space<vmem>>, %arg3: memref<8x64xf32, #tpu.memory_space<vmem>>) attributes {dimension_semantics = [], scalar_prefetch = 0 : i64, scratch_operands = 0 : i64, tpu.core_type = #tpu.core_type<tc>} {
    %c0 = arith.constant 0 : index
    %c0_0 = arith.constant 0 : index
    %0 = vector.load %arg0[%c0, %c0_0] : memref<8x256xf32, #tpu.memory_space<vmem>>, vector<8x256xf32>
    %c0_1 = arith.constant 0 : index
    %c0_2 = arith.constant 0 : index
    %1 = vector.load %arg1[%c0_1, %c0_2] : memref<64x256xf32, #tpu.memory_space<vmem>>, vector<64x256xf32>
    %cst = arith.constant dense<0.000000e+00> : vector<8x64xf32>
    %2 = tpu.matmul %0, %1, %cst {dimension_numbers = #tpu.dot_dimension_numbers<[1], [1], [0], [0], [0, 0, 1, 0], [], []>} : vector<8x256xf32>, vector<64x256xf32>, vector<8x64xf32> -> vector<8x64xf32>
    %c0_3 = arith.constant 0 : index
    %c0_4 = arith.constant 0 : index
    %3 = vector.load %arg2[%c0_3, %c0_4] : memref<1x64xf32, #tpu.memory_space<vmem>>, vector<1x64xf32>
    %4 = vector.broadcast %3 : vector<1x64xf32> to vector<8x64xf32>
    %5 = arith.addf %2, %4 : vector<8x64xf32>
    %6 = arith.negf %5 : vector<8x64xf32>
    %7 = math.exp %6 : vector<8x64xf32>
    %cst_5 = arith.constant 1.000000e+00 : f32
    %8 = vector.broadcast %cst_5 : f32 to vector<8x64xf32>
    %9 = arith.addf %8, %7 : vector<8x64xf32>
    %10 = arith.divf %8, %9 : vector<8x64xf32>
    %c0_6 = arith.constant 0 : index
    %c0_7 = arith.constant 0 : index
    %11 = vector.load %arg3[%c0_6, %c0_7] : memref<8x64xf32, #tpu.memory_space<vmem>>, vector<8x64xf32>
    tpu.vector_store %arg3[%c0_6, %c0_7], %10 {strides = array<i32>} : memref<8x64xf32, #tpu.memory_space<vmem>>, vector<8x64xf32>,
    return
  }
}

</mosaic_0001>

<llo_original>
// kernel: tpu_custom_call.1
$region0: #{tpu_custom_call.1}
  #allocation0 [shape = 'u32[]', space=smem, size = 0x4, offset = 0x4, fixed_abs, tag = 'smem constant byte address 0x4 - core index']
  #allocation1 [shape = 'u32[144,128]{1,0:T(1,128)}', space=vmem, size = 0x12000, scoped, tag = 'internal scratch']
  %s0 = inlined_call_operand.hbm [shape: f32[8,256], index: 0, kind: input, shape index: {}]
  %s1 = inlined_call_operand.hbm [shape: f32[64,256], index: 1, kind: input, shape index: {}]
  %s2 = inlined_call_operand.vmem [shape: f32[1,64], index: 2, kind: input, shape index: {}]
  %s3 = inlined_call_operand.hbm [shape: f32[8,64], index: 3, kind: output, shape index: {}]
  %s4 = sld [smem:[#allocation0]]
  $region30: #{tpu_custom_call.1} parent=0
    _
  %s6 = ssub.s32 1, %s4
  %s7 = scalar_select 0, %s6, %s4
  $region1: #{tpu_custom_call.1} parent=0
    #allocation2 [shape = 'u8[8192]{0}', space=vmem, size = 0x2000, scoped, tag = 'input window, operand 0, single buffered']
    #allocation3 [shape = 's32[1]{0}', space=sflag, size = 0x4, scoped, tag = 'scoped memory for tpu_custom_call.1']
    #allocation4 [shape = 's32[1]{0}', space=sflag, size = 0x4, scoped, tag = 'scoped memory for tpu_custom_call.1']
    #allocation5 [shape = 'u8[65536]{0}', space=vmem, size = 0x10000, scoped, tag = 'input window, operand 1, single buffered']
    #allocation6 [shape = 's32[1]{0}', space=sflag, size = 0x4, scoped, tag = 'scoped memory for tpu_custom_call.1']
    #allocation7 [shape = 'u8[4096]{0}', space=vmem, size = 0x1000, scoped, tag = 'output window, operand 0, single buffered']
    %8 = vsyncpa [#allocation3], 0
    %9 = vsyncpa [#allocation6], 0
    %10 = vsyncpa [#allocation4], 0
    // Predicated region
    $region2: #{tpu_custom_call.1} parent=1 // pred_check
      _
    $region3: #{tpu_custom_call.1} parent=1 // pred_check_branch
      %12 = sbr.rel (0) target = $region5
    $region4: #{tpu_custom_call.1} parent=1 // pred_region
      %s14 = ssub.s32 256, 256
      %15 = vsyncadd [#allocation3], %s14
      %s17 = sshll.u32 [#allocation2], 4
      %s18 = int_to_ptr.vmem [resolvable:$true] %s17
      %20 = dma.hbm_to_vmem [thread:$0]  %s0, 256, %s18, [#allocation3]
    $region5: #{tpu_custom_call.1} parent=1 // pred_fallthru
      _
    // Predicated region
    $region6: #{tpu_custom_call.1} parent=1 // pred_check
      _
    $region7: #{tpu_custom_call.1} parent=1 // pred_check_branch
      %22 = sbr.rel (0) target = $region9
    $region8: #{tpu_custom_call.1} parent=1 // pred_region
      %s24 = ssub.s32 2048, 2048
      %25 = vsyncadd [#allocation6], %s24
      %s26 = sshll.u32 [#allocation5], 4
      %s27 = int_to_ptr.vmem [resolvable:$true] %s26
      %32 = dma.hbm_to_vmem [thread:$0]  %s1, 2048, %s27, [#allocation6], 256, 256, 16
    $region9: #{tpu_custom_call.1} parent=1 // pred_fallthru
      _
    // Predicated region
    $region10: #{tpu_custom_call.1} parent=1 // pred_check
      _
    $region11: #{tpu_custom_call.1} parent=1 // pred_check_branch
      %34 = sbr.rel (0) target = $region13
    $region12: #{tpu_custom_call.1} parent=1 // pred_region
      _
    $region13: #{tpu_custom_call.1} parent=1 // pred_fallthru
      _
    // Predicated region
    $region14: #{tpu_custom_call.1} parent=1 // pred_check
      _
    $region15: #{tpu_custom_call.1} parent=1 // pred_check_branch
      %36 = sbr.rel (0) target = $region17
    $region16: #{tpu_custom_call.1} parent=1 // pred_region
      %37 = dma.done [#allocation3], 256
    $region17: #{tpu_custom_call.1} parent=1 // pred_fallthru
      _
    // Predicated region
    $region18: #{tpu_custom_call.1} parent=1 // pred_check
      _
    $region19: #{tpu_custom_call.1} parent=1 // pred_check_branch
      %39 = sbr.rel (0) target = $region21
    $region20: #{tpu_custom_call.1} parent=1 // pred_region
      %40 = dma.done [#allocation6], 2048
    $region21: #{tpu_custom_call.1} parent=1 // pred_fallthru
      _
    %v41 = vld [vmem:[#allocation2] sm:$0xff]
    %v42 = vld [vmem:[#allocation2 + $0x8] sm:$0xff]
    %v43 = vld [vmem:[#allocation5] sm:$0xff]
    %v44 = vld [vmem:[#allocation5 + $0x8] sm:$0xff]
    %v45 = vld [vmem:[#allocation5 + $0x10] sm:$0xff]
    %v46 = vld [vmem:[#allocation5 + $0x18] sm:$0xff]
    %v47 = vld [vmem:[#allocation5 + $0x20] sm:$0xff]
    %v48 = vld [vmem:[#allocation5 + $0x28] sm:$0xff]
    %v49 = vld [vmem:[#allocation5 + $0x30] sm:$0xff]
    %v50 = vld [vmem:[#allocation5 + $0x38] sm:$0xff]
    %v51 = vld [vmem:[#allocation5 + $0x40] sm:$0xff]
    %v52 = vld [vmem:[#allocation5 + $0x48] sm:$0xff]
    %v53 = vld [vmem:[#allocation5 + $0x50] sm:$0xff]
    %v54 = vld [vmem:[#allocation5 + $0x58] sm:$0xff]
    %v55 = vld [vmem:[#allocation5 + $0x60] sm:$0xff]
    %v56 = vld [vmem:[#allocation5 + $0x68] sm:$0xff]
    %v57 = vld [vmem:[#allocation5 + $0x70] sm:$0xff]
    %v58 = vld [vmem:[#allocation5 + $0x78] sm:$0xff]
    %v59 = vld [vmem:[%s2] sm:$0x1]
    %v61 = vlaneseq
    %v62 = vshrl.u32 %v61, 7
    %v63 = vsub.s32 0, %v62
    %v64 = vrot.slane %v59, %v63
    %66 = vmatprep.subr.mxu0 %v44
    %67 = vmatpush1.xpose.msra.mxu0 %v43
    %68 = vmatprep.subr.mxu0 %v46
    %69 = vmatpush1.xpose.msra.mxu0 %v45
    %70 = vmatprep.subr.mxu0 %v48
    %71 = vmatpush1.xpose.msra.mxu0 %v47
    %72 = vmatprep.subr.mxu0 %v50
    %73 = vmatpush1.xpose.msra.mxu0 %v49
    %74 = vmatprep.subr.mxu0 %v52
    %75 = vmatpush1.xpose.msra.mxu0 %v51
    %76 = vmatprep.subr.mxu0 %v54
    %77 = vmatpush1.xpose.msra.mxu0 %v53
    %78 = vmatprep.subr.mxu0 %v56
    %79 = vmatpush1.xpose.msra.mxu0 %v55
    %80 = vmatprep.subr.mxu0 %v58
    %81 = vmatpush1.xpose.msra.mxu0 %v57
    %82 = vmatprep.subr.mxu0 0.0
    %83 = vmatpush1.xpose.msra.mxu0 0.0
    %84 = vmatprep.subr.mxu0 0.0
    %85 = vmatpush1.xpose.msra.mxu0 0.0
    %86 = vmatprep.subr.mxu0 0.0
    %87 = vmatpush1.xpose.msra.mxu0 0.0
    %88 = vmatprep.subr.mxu0 0.0
    %89 = vmatpush1.xpose.msra.mxu0 0.0
    %90 = vmatprep.subr.mxu0 0.0
    %91 = vmatpush1.xpose.msra.mxu0 0.0
    %92 = vmatprep.subr.mxu0 0.0
    %93 = vmatpush1.xpose.msra.mxu0 0.0
    %94 = vmatprep.subr.mxu0 0.0
    %95 = vmatpush1.xpose.msra.mxu0 0.0
    %96 = vmatprep.subr.mxu0 0.0
    %97 = vmatpush1.xpose.msra.mxu0 0.0
    %98 = vmatprep.subr.mxu0 0.0
    %99 = vmatpush1.xpose.msra.mxu0 0.0
    %100 = vmatprep.subr.mxu0 0.0
    %101 = vmatpush1.xpose.msra.mxu0 0.0
    %102 = vmatprep.subr.mxu0 0.0
    %103 = vmatpush1.xpose.msra.mxu0 0.0
    %104 = vmatprep.subr.mxu0 0.0
    %105 = vmatpush1.xpose.msra.mxu0 0.0
    %106 = vmatprep.subr.mxu0 0.0
    %107 = vmatpush1.xpose.msra.mxu0 0.0
    %108 = vmatprep.subr.mxu0 0.0
    %109 = vmatpush1.xpose.msra.mxu0 0.0
    %110 = vmatprep.subr.mxu0 0.0
    %111 = vmatpush1.xpose.msra.mxu0 0.0
    %112 = vmatprep.subr.mxu0 0.0
    %113 = vmatpush1.xpose.msra.mxu0 0.0
    %114 = vmatprep.subr.mxu0 0.0
    %115 = vmatpush1.xpose.msra.mxu0 0.0
    %116 = vmatprep.subr.mxu0 0.0
    %117 = vmatpush1.xpose.msra.mxu0 0.0
    %118 = vmatprep.subr.mxu0 0.0
    %119 = vmatpush1.xpose.msra.mxu0 0.0
    %120 = vmatprep.subr.mxu0 0.0
    %121 = vmatpush1.xpose.msra.mxu0 0.0
    %122 = vmatprep.subr.mxu0 0.0
    %123 = vmatpush1.xpose.msra.mxu0 0.0
    %124 = vmatprep.subr.mxu0 0.0
    %125 = vmatpush1.xpose.msra.mxu0 0.0
    %126 = vmatprep.subr.mxu0 0.0
    %127 = vmatpush1.xpose.msra.mxu0 0.0
    %128 = vmatprep.subr.mxu0 0.0
    %129 = vmatpush1.xpose.msra.mxu0 0.0
    %130 = vmatprep.mubr.f32.mxu0 %v42
    %131 = vmatmul.mubr.f32.gmra.mrb[0].mxu0 %v41
    %v132 = vpop.f32.mrb[0].mxu0
    %v133 = vadd.f32 %v64, %v132
    %v134 = vpop.f32.mrb[0].mxu0
    %135 = vdwg.mxu0
    %v136 = vxor.u32 %v133, 2147483648
    %v137 = vmul.f32 %v136, 1.442695
    %v138 = vpow.pop %v137
    %v139 = vadd.f32 %v138, 1.0
    %v140 = vrcp.pop %v139
    %v141 = vmul.f32 1.0, %v140
    %vm142 = vcmask 523264
    %143 = vst.msk [vmem:[#allocation7] sm:$0xff] %vm142, %v141
    // Predicated region
    $region22: #{tpu_custom_call.1} parent=1 // pred_check
      _
    $region23: #{tpu_custom_call.1} parent=1 // pred_check_branch
      %145 = sbr.rel (0) target = $region25
    $region24: #{tpu_custom_call.1} parent=1 // pred_region
      %s147 = ssub.s32 128, 128
      %148 = vsyncadd [#allocation4], %s147
      %s150 = sshll.u32 [#allocation7], 4
      %s151 = int_to_ptr.vmem [resolvable:$true] %s150
      %153 = dma.vmem_to_hbm [thread:$0]  %s151, 128, %s3, [#allocation4]
    $region25: #{tpu_custom_call.1} parent=1 // pred_fallthru
      _
    // Predicated region
    $region26: #{tpu_custom_call.1} parent=1 // pred_check
      _
    $region27: #{tpu_custom_call.1} parent=1 // pred_check_branch
      %155 = sbr.rel (0) target = $region29
    $region28: #{tpu_custom_call.1} parent=1 // pred_region
      %156 = dma.done [#allocation4], 128
    $region29: #{tpu_custom_call.1} parent=1 // pred_fallthru
      _
    %157 = vsyncpa [#allocation3], 1
    %158 = vsyncpa [#allocation6], 1
    %159 = vsyncpa [#allocation4], 1

</llo_original>
